<compile_context>
chip_gen: v6e
topology: v6e:2x2x1
jax: 0.10.0
libtpu: 0.0.40
codegen_flags: <defaults>
</compile_context>

<pallas_src>
import functools
import math

import jax
import jax.numpy as jnp
from jax.experimental import pallas as pl
from jax.experimental.pallas import tpu as pltpu

HIDDEN = 128        # hidden width of the DQN MLP
TILE_B_MAX = 1024   # max batch tile; per-block VMEM stays well under default limits


def _round_up(n, m):
    return ((n + m - 1) // m) * m


def _choose_tiling(B):
    """Balanced batch tiles: >= 2 tiles when B >= 16 (feeds both v7x TCs),
    tile size capped at TILE_B_MAX, padding waste capped at < 8 rows."""
    bp8 = _round_up(B, 8)
    n_tiles = max(pl.cdiv(bp8, TILE_B_MAX), 2 if bp8 >= 16 else 1)
    tile_b = _round_up(pl.cdiv(bp8, n_tiles), 8)
    bp = _round_up(bp8, tile_b)
    return tile_b, bp


def dqn_kernel(x_ref, w1_ref, b1_ref, w2_ref, b2_ref, w3_ref, b3_ref,
               q_ref, act_ref, *, n_actions):
    # ---- Layer 1: K = n_observations (4) is far too small to feed the MXU,
    # so do it as a handful of VPU broadcast FMAs in f32 (frees an MXU pass).
    x = x_ref[...]                       # (tile_b, n_obs)  f32
    w1 = w1_ref[...]                     # (n_obs, HIDDEN)  f32
    n_obs = x_ref.shape[1]
    h1 = b1_ref[...] + x[:, 0:1] * w1[0:1, :]
    for k in range(1, n_obs):            # static trip count -> unrolled at trace time
        h1 = h1 + x[:, k:k + 1] * w1[k:k + 1, :]
    h1 = jnp.maximum(h1, 0.0).astype(jnp.bfloat16)

    # ---- Layers 2/3: bf16 operands on the MXU, f32 accumulation, f32 bias add.
    h2 = jnp.dot(h1, w2_ref[...], preferred_element_type=jnp.float32) + b2_ref[...]
    h2 = jnp.maximum(h2, 0.0).astype(jnp.bfloat16)
    q = jnp.dot(h2, w3_ref[...], preferred_element_type=jnp.float32) + b3_ref[...]

    # Narrow (tile_b, ACT_PAD) Q store; padded columns carry zero weight/bias.
    q_ref[...] = q.astype(q_ref.dtype)

    # ---- Fused greedy-action reduction (first-occurrence argmax over the
    # real n_actions columns), all cheap VPU/XLU work on an 8-lane slab.
    lane = jax.lax.broadcasted_iota(jnp.int32, q.shape, dimension=1)
    valid = lane < n_actions
    q_masked = jnp.where(valid, q, -jnp.inf)
    q_max = jnp.max(q_masked, axis=-1, keepdims=True)
    cand = jnp.where((q_masked == q_max) & valid,
                     lane.astype(jnp.float32), float(q.shape[1]))
    act = jnp.min(cand, axis=-1, keepdims=True).astype(jnp.int32)
    act_ref[...] = jnp.broadcast_to(act, act_ref.shape)


def dqn_forward_raw(x, prepared_params, n_actions, q_dtype=jnp.float32):
    """Single fused pallas_call.

    Returns:
      q_pad: (Bp, ACT_PAD) q_dtype — Q-values; columns >= n_actions and rows >= B
             are padding.  Index lazily downstream instead of slicing eagerly.
      act:   (Bp, ACT_PAD) int32   — greedy action (broadcast across lanes; use
             lane 0).  Lets action selection skip the Q-value round trip.
    """
    w1, b1, w2, b2, w3, b3 = prepared_params
    B, n_obs = x.shape
    act_pad = w3.shape[1]

    tile_b, Bp = _choose_tiling(B)
    if Bp != B:
        x = jnp.pad(x, ((0, Bp - B), (0, 0)))
    grid = (Bp // tile_b,)

    flops = 2 * Bp * (n_obs * HIDDEN + HIDDEN * HIDDEN + HIDDEN * act_pad)
    bytes_accessed = (
        Bp * n_obs * 4
        + sum(int(p.size) * p.dtype.itemsize for p in prepared_params)
        + Bp * act_pad * jnp.dtype(q_dtype).itemsize
        + Bp * act_pad * 4
    )

    kernel = functools.partial(dqn_kernel, n_actions=n_actions)

    q_pad, act = pl.pallas_call(
        kernel,
        out_shape=(
            jax.ShapeDtypeStruct((Bp, act_pad), q_dtype),
            jax.ShapeDtypeStruct((Bp, act_pad), jnp.int32),
        ),
        grid=grid,
        in_specs=[
            pl.BlockSpec((tile_b, n_obs), lambda i: (i, 0)),     # x: tiled over batch
            # Constant index_map -> weights/biases stay VMEM-resident, no re-DMA.
            # TODO(synk): pipeline_mode=pl.Buffered(1) would drop the redundant
            # second buffer (~70 KB of VMEM); skipped here as hygiene-only.
            pl.BlockSpec((n_obs, HIDDEN), lambda i: (0, 0)),     # w1 (f32, VPU)
            pl.BlockSpec((1, HIDDEN), lambda i: (0, 0)),         # b1 (f32)
            pl.BlockSpec((HIDDEN, HIDDEN), lambda i: (0, 0)),    # w2 (bf16, MXU)
            pl.BlockSpec((1, HIDDEN), lambda i: (0, 0)),         # b2 (f32)
            pl.BlockSpec((HIDDEN, act_pad), lambda i: (0, 0)),   # w3 narrow (bf16)
            pl.BlockSpec((1, act_pad), lambda i: (0, 0)),        # b3 narrow (f32)
        ],
        out_specs=(
            pl.BlockSpec((tile_b, act_pad), lambda i: (i, 0)),   # Q-values
            pl.BlockSpec((tile_b, act_pad), lambda i: (i, 0)),   # greedy action
        ),
        compiler_params=pltpu.CompilerParams(
            dimension_semantics=("parallel",),
        ),
        cost_estimate=pl.CostEstimate(
            flops=flops, transcendentals=0, bytes_accessed=bytes_accessed,
        ),
    )(x, w1, b1, w2, b2, w3, b3)

    return q_pad, act


def dqn_forward(x, prepared_params, n_actions):
    """PyTorch-equivalent forward: (B, n_actions) Q-values.  Hot action-selection
    paths should consume dqn_forward_raw's outputs directly (the slice below is
    an extra XLA copy kernel, kept off the fast path by design)."""
    q_pad, _ = dqn_forward_raw(x, prepared_params, n_actions)
    return q_pad[: x.shape[0], :n_actions]


def init_dqn_params(key, n_observations, n_actions, hidden=HIDDEN):
    """Deterministic init mirroring torch.nn.Linear default:
    U(-1/sqrt(fan_in), 1/sqrt(fan_in)) for both weights and biases."""
    keys = jax.random.split(key, 6)

    def linear(kw, kb, fan_in, fan_out):
        bound = 1.0 / math.sqrt(fan_in)
        w = jax.random.uniform(kw, (fan_in, fan_out), jnp.float32, -bound, bound)
        b = jax.random.uniform(kb, (1, fan_out), jnp.float32, -bound, bound)
        return w, b

    w1, b1 = linear(keys[0], keys[1], n_observations, hidden)
    w2, b2 = linear(keys[2], keys[3], hidden, hidden)
    w3, b3 = linear(keys[4], keys[5], hidden, n_actions)
    return (w1, b1, w2, b2, w3, b3)


def prepare_params(params, n_actions):
    """One-time conversion to the kernel's layout/dtypes:
       - w2, w3 -> bf16 (MXU operands); w1 stays f32 (only used on the VPU).
       - biases stay f32 (added to f32 accumulators).
       - layer-3 weight/bias zero-padded to a narrow ACT_PAD=8 lane slab."""
    w1, b1, w2, b2, w3, b3 = params
    act_pad = _round_up(max(n_actions, 1), 8)
    w3p = jnp.zeros((HIDDEN, act_pad), jnp.float32).at[:, :n_actions].set(w3)
    b3p = jnp.zeros((1, act_pad), jnp.float32).at[:, :n_actions].set(b3)
    return (
        w1,
        b1,
        w2.astype(jnp.bfloat16),
        b2,
        w3p.astype(jnp.bfloat16),
        b3p,
    )


def dqn_reference(x, prepared_params, n_actions):
    """Pure-JAX reference mirroring the kernel's numerics (f32 layer 1, bf16 MXU
    operands with f32 accumulation for layers 2/3)."""
    w1, b1, w2, b2, w3, b3 = prepared_params
    h1 = jnp.maximum(
        jnp.dot(x, w1, precision=jax.lax.Precision.HIGHEST) + b1, 0.0
    ).astype(jnp.bfloat16)
    h2 = jnp.maximum(
        jnp.dot(h1, w2, preferred_element_type=jnp.float32) + b2, 0.0
    ).astype(jnp.bfloat16)
    out = jnp.dot(h2, w3, preferred_element_type=jnp.float32) + b3
    return out[:, :n_actions]


if __name__ == "__main__":
    # CartPole-v1: n_observations = 4, n_actions = 2; realistic DQN replay batch.
    n_observations, n_actions, batch = 4, 2, 128

    key = jax.random.PRNGKey(0)
    k_x, k_p = jax.random.split(key)
    x = jax.random.normal(k_x, (batch, n_observations), jnp.float32)
    params = init_dqn_params(k_p, n_observations, n_actions)
    prepared = prepare_params(params, n_actions)

    # jit the whole wrapper so launch/dispatch overhead is paid once per step.
    # TODO(synk): evaluate policy-net and target-net batches in a single call
    # (extra leading grid axis / second weight set) to amortize the DMA prologue.
    fwd = jax.jit(functools.partial(dqn_forward_raw, n_actions=n_actions))

    q_pad, act = jax.block_until_ready(fwd(x, prepared))

    # Correctness: Q-values vs a pure-JAX reference with matching numerics.
    q = q_pad[:batch, :n_actions]     # slice only for the check, off the hot path
    ref = dqn_reference(x, prepared, n_actions)
    assert q.shape == (batch, n_actions)
    assert jnp.allclose(q, ref, atol=1e-2, rtol=1e-2), "mismatch vs JAX reference"

    # Fused greedy action must equal argmax of the kernel's own Q output.
    ref_act = jnp.argmax(q, axis=-1).astype(jnp.int32)
    assert jnp.array_equal(act[:batch, 0], ref_act), "fused argmax mismatch"

    print("KERNEL_OK")
</pallas_src>

<mosaic_0001>
module attributes {stable_mosaic.version = 11 : i64} {
  func.func @dqn_kernel(%arg0: i32, %arg1: memref<64x4xf32, #tpu.memory_space<vmem>>, %arg2: memref<4x128xf32, #tpu.memory_space<vmem>>, %arg3: memref<1x128xf32, #tpu.memory_space<vmem>>, %arg4: memref<128x128xbf16, #tpu.memory_space<vmem>>, %arg5: memref<1x128xf32, #tpu.memory_space<vmem>>, %arg6: memref<128x8xbf16, #tpu.memory_space<vmem>>, %arg7: memref<1x8xf32, #tpu.memory_space<vmem>>, %arg8: memref<64x8xf32, #tpu.memory_space<vmem>>, %arg9: memref<64x8xi32, #tpu.memory_space<vmem>>) attributes {dimension_semantics = [#tpu.dimension_semantics<parallel>], iteration_bounds = array<i64: 2>, scalar_prefetch = 0 : i64, scratch_operands = 0 : i64, tpu.core_type = #tpu.core_type<tc>, window_params = [{transform_indices = @transform_0, window_bounds = array<i64: 64, 4>}, {pipeline_mode = #tpu.pipeline_mode<synchronous>, transform_indices = @transform_1, window_bounds = array<i64: 4, 128>}, {pipeline_mode = #tpu.pipeline_mode<synchronous>, transform_indices = @transform_2, window_bounds = array<i64: 1, 128>}, {pipeline_mode = #tpu.pipeline_mode<synchronous>, transform_indices = @transform_3, window_bounds = array<i64: 128, 128>}, {pipeline_mode = #tpu.pipeline_mode<synchronous>, transform_indices = @transform_4, window_bounds = array<i64: 1, 128>}, {pipeline_mode = #tpu.pipeline_mode<synchronous>, transform_indices = @transform_5, window_bounds = array<i64: 128, 8>}, {pipeline_mode = #tpu.pipeline_mode<synchronous>, transform_indices = @transform_6, window_bounds = array<i64: 1, 8>}, {transform_indices = @transform_7, window_bounds = array<i64: 64, 8>}, {transform_indices = @transform_8, window_bounds = array<i64: 64, 8>}]} {
    %c0 = arith.constant 0 : index
    %c0_0 = arith.constant 0 : index
    %0 = vector.load %arg1[%c0, %c0_0] : memref<64x4xf32, #tpu.memory_space<vmem>>, vector<64x4xf32>
    %c0_1 = arith.constant 0 : index
    %c0_2 = arith.constant 0 : index
    %1 = vector.load %arg2[%c0_1, %c0_2] : memref<4x128xf32, #tpu.memory_space<vmem>>, vector<4x128xf32>
    %c0_3 = arith.constant 0 : index
    %c0_4 = arith.constant 0 : index
    %2 = vector.load %arg3[%c0_3, %c0_4] : memref<1x128xf32, #tpu.memory_space<vmem>>, vector<1x128xf32>
    %3 = vector.extract_strided_slice %0 {offsets = [0, 0], sizes = [64, 1], strides = [1, 1]} : vector<64x4xf32> to vector<64x1xf32>
    %4 = vector.extract_strided_slice %1 {offsets = [0, 0], sizes = [1, 128], strides = [1, 1]} : vector<4x128xf32> to vector<1x128xf32>
    %5 = vector.broadcast %3 : vector<64x1xf32> to vector<64x128xf32>
    %6 = vector.broadcast %4 : vector<1x128xf32> to vector<64x128xf32>
    %7 = arith.mulf %5, %6 : vector<64x128xf32>
    %8 = vector.broadcast %2 : vector<1x128xf32> to vector<64x128xf32>
    %9 = arith.addf %8, %7 : vector<64x128xf32>
    %10 = vector.extract_strided_slice %0 {offsets = [0, 1], sizes = [64, 1], strides = [1, 1]} : vector<64x4xf32> to vector<64x1xf32>
    %11 = vector.extract_strided_slice %1 {offsets = [1, 0], sizes = [1, 128], strides = [1, 1]} : vector<4x128xf32> to vector<1x128xf32>
    %12 = vector.broadcast %10 : vector<64x1xf32> to vector<64x128xf32>
    %13 = vector.broadcast %11 : vector<1x128xf32> to vector<64x128xf32>
    %14 = arith.mulf %12, %13 : vector<64x128xf32>
    %15 = arith.addf %9, %14 : vector<64x128xf32>
    %16 = vector.extract_strided_slice %0 {offsets = [0, 2], sizes = [64, 1], strides = [1, 1]} : vector<64x4xf32> to vector<64x1xf32>
    %17 = vector.extract_strided_slice %1 {offsets = [2, 0], sizes = [1, 128], strides = [1, 1]} : vector<4x128xf32> to vector<1x128xf32>
    %18 = vector.broadcast %16 : vector<64x1xf32> to vector<64x128xf32>
    %19 = vector.broadcast %17 : vector<1x128xf32> to vector<64x128xf32>
    %20 = arith.mulf %18, %19 : vector<64x128xf32>
    %21 = arith.addf %15, %20 : vector<64x128xf32>
    %22 = vector.extract_strided_slice %0 {offsets = [0, 3], sizes = [64, 1], strides = [1, 1]} : vector<64x4xf32> to vector<64x1xf32>
    %23 = vector.extract_strided_slice %1 {offsets = [3, 0], sizes = [1, 128], strides = [1, 1]} : vector<4x128xf32> to vector<1x128xf32>
    %24 = vector.broadcast %22 : vector<64x1xf32> to vector<64x128xf32>
    %25 = vector.broadcast %23 : vector<1x128xf32> to vector<64x128xf32>
    %26 = arith.mulf %24, %25 : vector<64x128xf32>
    %27 = arith.addf %21, %26 : vector<64x128xf32>
    %cst = arith.constant 0.000000e+00 : f32
    %28 = vector.broadcast %cst : f32 to vector<64x128xf32>
    %29 = arith.maximumf %27, %28 : vector<64x128xf32>
    %30 = arith.truncf %29 : vector<64x128xf32> to vector<64x128xbf16>
    %c0_5 = arith.constant 0 : index
    %c0_6 = arith.constant 0 : index
    %31 = vector.load %arg4[%c0_5, %c0_6] : memref<128x128xbf16, #tpu.memory_space<vmem>>, vector<128x128xbf16>
    %cst_7 = arith.constant dense<0.000000e+00> : vector<64x128xf32>
    %32 = tpu.matmul %30, %31, %cst_7 {dimension_numbers = #tpu.dot_dimension_numbers<[1], [0], [0], [1], [0, 0, 1, 1], [], []>} : vector<64x128xbf16>, vector<128x128xbf16>, vector<64x128xf32> -> vector<64x128xf32>
    %c0_8 = arith.constant 0 : index
    %c0_9 = arith.constant 0 : index
    %33 = vector.load %arg5[%c0_8, %c0_9] : memref<1x128xf32, #tpu.memory_space<vmem>>, vector<1x128xf32>
    %34 = vector.broadcast %33 : vector<1x128xf32> to vector<64x128xf32>
    %35 = arith.addf %32, %34 : vector<64x128xf32>
    %cst_10 = arith.constant 0.000000e+00 : f32
    %36 = vector.broadcast %cst_10 : f32 to vector<64x128xf32>
    %37 = arith.maximumf %35, %36 : vector<64x128xf32>
    %38 = arith.truncf %37 : vector<64x128xf32> to vector<64x128xbf16>
    %c0_11 = arith.constant 0 : index
    %c0_12 = arith.constant 0 : index
    %39 = vector.load %arg6[%c0_11, %c0_12] : memref<128x8xbf16, #tpu.memory_space<vmem>>, vector<128x8xbf16>
    %cst_13 = arith.constant dense<0.000000e+00> : vector<64x8xf32>
    %40 = tpu.matmul %38, %39, %cst_13 {dimension_numbers = #tpu.dot_dimension_numbers<[1], [0], [0], [1], [0, 0, 1, 1], [], []>} : vector<64x128xbf16>, vector<128x8xbf16>, vector<64x8xf32> -> vector<64x8xf32>
    %c0_14 = arith.constant 0 : index
    %c0_15 = arith.constant 0 : index
    %41 = vector.load %arg7[%c0_14, %c0_15] : memref<1x8xf32, #tpu.memory_space<vmem>>, vector<1x8xf32>
    %42 = vector.broadcast %41 : vector<1x8xf32> to vector<64x8xf32>
    %43 = arith.addf %40, %42 : vector<64x8xf32>
    %c0_16 = arith.constant 0 : index
    %c0_17 = arith.constant 0 : index
    %44 = vector.load %arg8[%c0_16, %c0_17] : memref<64x8xf32, #tpu.memory_space<vmem>>, vector<64x8xf32>
    tpu.vector_store %arg8[%c0_16, %c0_17], %43 {strides = array<i32>} : memref<64x8xf32, #tpu.memory_space<vmem>>, vector<64x8xf32>,
    %45 = tpu.iota {dimensions = array<i32: 1>} : vector<64x8xi32>
    %c2_i32 = arith.constant 2 : i32
    %46 = vector.broadcast %c2_i32 : i32 to vector<64x8xi32>
    %47 = arith.cmpi slt, %45, %46 : vector<64x8xi32>
    %cst_18 = arith.constant 0xFF800000 : f32
    %48 = vector.broadcast %cst_18 : f32 to vector<64x8xf32>
    %49 = arith.select %47, %43, %48 : vector<64x8xi1>, vector<64x8xf32>
    %cst_19 = arith.constant dense<0xFF800000> : vector<64xf32>
    %50 = vector.multi_reduction <maximumf>, %49, %cst_19 [1] : vector<64x8xf32> to vector<64xf32>
    %51 = vector.shape_cast %50 : vector<64xf32> to vector<64x1xf32>
    %52 = vector.broadcast %51 : vector<64x1xf32> to vector<64x8xf32>
    %53 = arith.cmpf oeq, %49, %52 : vector<64x8xf32>
    %54 = arith.andi %53, %47 : vector<64x8xi1>
    %55 = arith.sitofp %45 : vector<64x8xi32> to vector<64x8xf32>
    %cst_20 = arith.constant 8.000000e+00 : f32
    %56 = vector.broadcast %cst_20 : f32 to vector<64x8xf32>
    %57 = arith.select %54, %55, %56 : vector<64x8xi1>, vector<64x8xf32>
    %cst_21 = arith.constant dense<0x7F800000> : vector<64xf32>
    %58 = vector.multi_reduction <minimumf>, %57, %cst_21 [1] : vector<64x8xf32> to vector<64xf32>
    %59 = vector.shape_cast %58 : vector<64xf32> to vector<64x1xf32>
    %60 = arith.fptosi %59 : vector<64x1xf32> to vector<64x1xi32>
    %61 = vector.shape_cast %60 : vector<64x1xi32> to vector<64x1xi32>
    %62 = vector.broadcast %61 : vector<64x1xi32> to vector<64x8xi32>
    %c0_22 = arith.constant 0 : index
    %c0_23 = arith.constant 0 : index
    %63 = vector.load %arg9[%c0_22, %c0_23] : memref<64x8xi32, #tpu.memory_space<vmem>>, vector<64x8xi32>
    tpu.vector_store %arg9[%c0_22, %c0_23], %62 {strides = array<i32>} : memref<64x8xi32, #tpu.memory_space<vmem>>, vector<64x8xi32>,
    return
  }
  func.func @transform_0(%arg0: i32) -> (i32, i32) {
    %c0_i32 = arith.constant 0 : i32
    %c0_i32_0 = arith.constant 0 : i32
    return %arg0, %c0_i32 : i32, i32
  }
  func.func @transform_1(%arg0: i32) -> (i32, i32) {
    %c0_i32 = arith.constant 0 : i32
    %c0_i32_0 = arith.constant 0 : i32
    %c0_i32_1 = arith.constant 0 : i32
    return %c0_i32, %c0_i32_0 : i32, i32
  }
  func.func @transform_2(%arg0: i32) -> (i32, i32) {
    %c0_i32 = arith.constant 0 : i32
    %c0_i32_0 = arith.constant 0 : i32
    %c0_i32_1 = arith.constant 0 : i32
    return %c0_i32, %c0_i32_0 : i32, i32
  }
  func.func @transform_3(%arg0: i32) -> (i32, i32) {
    %c0_i32 = arith.constant 0 : i32
    %c0_i32_0 = arith.constant 0 : i32
    %c0_i32_1 = arith.constant 0 : i32
    return %c0_i32, %c0_i32_0 : i32, i32
  }
  func.func @transform_4(%arg0: i32) -> (i32, i32) {
    %c0_i32 = arith.constant 0 : i32
    %c0_i32_0 = arith.constant 0 : i32
    %c0_i32_1 = arith.constant 0 : i32
    return %c0_i32, %c0_i32_0 : i32, i32
  }
  func.func @transform_5(%arg0: i32) -> (i32, i32) {
    %c0_i32 = arith.constant 0 : i32
    %c0_i32_0 = arith.constant 0 : i32
    %c0_i32_1 = arith.constant 0 : i32
    return %c0_i32, %c0_i32_0 : i32, i32
  }
  func.func @transform_6(%arg0: i32) -> (i32, i32) {
    %c0_i32 = arith.constant 0 : i32
    %c0_i32_0 = arith.constant 0 : i32
    %c0_i32_1 = arith.constant 0 : i32
    return %c0_i32, %c0_i32_0 : i32, i32
  }
  func.func @transform_7(%arg0: i32) -> (i32, i32) {
    %c0_i32 = arith.constant 0 : i32
    %c0_i32_0 = arith.constant 0 : i32
    return %arg0, %c0_i32 : i32, i32
  }
  func.func @transform_8(%arg0: i32) -> (i32, i32) {
    %c0_i32 = arith.constant 0 : i32
    %c0_i32_0 = arith.constant 0 : i32
    return %arg0, %c0_i32 : i32, i32
  }
}

</mosaic_0001>

<llo_original>
// kernel: dqn_forward_raw.1
$region0: #{dqn_forward_raw.1}
  #allocation0 [shape = 'u32[]', space=smem, size = 0x4, offset = 0x4, fixed_abs, tag = 'smem constant byte address 0x4 - core index']
  #allocation1 [shape = 'u32[144,128]{1,0:T(1,128)}', space=vmem, size = 0x12000, scoped, tag = 'internal scratch']
  %s0 = inlined_call_operand.vmem [shape: f32[128,4], index: 0, kind: input, shape index: {}]
  %s1 = inlined_call_operand.vmem [shape: f32[4,128], index: 1, kind: input, shape index: {}]
  %s2 = inlined_call_operand.vmem [shape: f32[1,128], index: 2, kind: input, shape index: {}]
  %s3 = inlined_call_operand.vmem [shape: bf16[128,128], index: 3, kind: input, shape index: {}]
  %s4 = inlined_call_operand.vmem [shape: f32[1,128], index: 4, kind: input, shape index: {}]
  %s5 = inlined_call_operand.vmem [shape: bf16[128,8], index: 5, kind: input, shape index: {}]
  %s6 = inlined_call_operand.vmem [shape: f32[1,8], index: 6, kind: input, shape index: {}]
  %s7 = inlined_call_operand.vmem [shape: f32[128,8], index: 7, kind: output, shape index: {0}]
  %s8 = inlined_call_operand.vmem [shape: s32[128,8], index: 8, kind: output, shape index: {1}]
  %9 = xla_tuple %s7, %s8
  %s10 = sld [smem:[#allocation0]]
  $region69: #{dqn_forward_raw.1} parent=0
    _
  %s12 = ssub.s32 1, %s10
  %s13 = scalar_select 0, %s12, %s10
  loop: start=0, step=1, limit=4
  $region2: #{dqn_forward_raw.1} parent=0 // loop_pre_header
    _
  $region3: #{dqn_forward_raw.1} parent=0 // loop_header
    %s15 = sphi 0, %s19
    %p16 = scmp.ge.s32.totalorder %s15, 4
    %s25 = sphi 0, %s27
    %s28 = sphi 0, %s25
    %s29 = sphi 0, %s28
    %s45 = sphi 0, %s29
    %s49 = sphi 0, %s49
    %s51 = sphi 0, %s49
    %s52 = sphi 0, %s51
    %s66 = sphi 0, %s52
    %s70 = sphi 0, %s70
    %s72 = sphi 0, %s70
    %s73 = sphi 0, %s72
    %s87 = sphi 0, %s73
    %s91 = sphi 0, %s91
    %s93 = sphi 0, %s91
    %s94 = sphi 0, %s93
    %s108 = sphi 0, %s94
    %s112 = sphi 0, %s112
    %s114 = sphi 0, %s112
    %s115 = sphi 0, %s114
    %s129 = sphi 0, %s115
    %s133 = sphi 0, %s133
    %s135 = sphi 0, %s133
    %s136 = sphi 0, %s135
    %s150 = sphi 0, %s136
    %s154 = sphi 0, %s154
    %s156 = sphi 0, %s154
    %s157 = sphi 0, %s156
    %s171 = sphi 0, %s157
    %s177 = sphi 0, %s179
    %s180 = sphi 0, %s177
    %s181 = sphi 0, %s180
    %s197 = sphi 0, %s181
    %s203 = sphi 0, %s205
    %s206 = sphi 0, %s203
    %s207 = sphi 0, %s206
    %s223 = sphi 0, %s207
  $region4: #{dqn_forward_raw.1} parent=0 // loop_header_branch
    %18 = sbr.rel (%p16) target = $region8
  $region5: #{dqn_forward_raw.1} parent=0 // loop_body
    %s20 = ssub.s32 %s15, 1
    %s21 = ssub.s32 %s15, 2
    %s22 = sadd.s32 %s15, 1
    %s23 = ssub.s32 %s15, %s22
    %p24 = scmp.eq.s32.totalorder %s23, 0
    %s26 = sadd.s32 %s25, 1
    %s27 = scalar_select %p24, %s25, %s26
    %p30 = pneg %p24
    %p31 = scmp.eq.s32.totalorder %s15, 1
    %p32 = por %p30, %p31
    %p33 = scmp.ne.s32.totalorder %s25, %s28
    %p34 = scmp.eq.s32.totalorder %s15, 0
    %p35 = por %p33, %p34
    %p36 = scmp.ne.s32.totalorder %s25, %s28
    %p37 = scmp.eq.s32.totalorder %s20, 1
    %p38 = por %p36, %p37
    %p39 = scmp.ne.s32.totalorder %s28, %s29
    %p40 = scmp.eq.s32.totalorder %s20, 0
    %p41 = por %p39, %p40
    %p42 = scmp.ne.s32.totalorder %s28, %s29
    %p43 = scmp.eq.s32.totalorder %s21, 1
    %p44 = por %p42, %p43
    %p46 = scmp.ne.s32.totalorder %s29, %s45
    %p47 = scmp.eq.s32.totalorder %s21, 0
    %p48 = por %p46, %p47
    %s50 = sadd.s32 %s49, 1
    %p53 = scmp.eq.s32.totalorder %s15, 1
    %p54 = scmp.ne.s32.totalorder %s49, %s51
    %p55 = scmp.eq.s32.totalorder %s15, 0
    %p56 = por %p54, %p55
    %p57 = scmp.ne.s32.totalorder %s49, %s51
    %p58 = scmp.eq.s32.totalorder %s20, 1
    %p59 = por %p57, %p58
    %p60 = scmp.ne.s32.totalorder %s51, %s52
    %p61 = scmp.eq.s32.totalorder %s20, 0
    %p62 = por %p60, %p61
    %p63 = scmp.ne.s32.totalorder %s51, %s52
    %p64 = scmp.eq.s32.totalorder %s21, 1
    %p65 = por %p63, %p64
    %p67 = scmp.ne.s32.totalorder %s52, %s66
    %p68 = scmp.eq.s32.totalorder %s21, 0
    %p69 = por %p67, %p68
    %s71 = sadd.s32 %s70, 1
    %p74 = scmp.eq.s32.totalorder %s15, 1
    %p75 = scmp.ne.s32.totalorder %s70, %s72
    %p76 = scmp.eq.s32.totalorder %s15, 0
    %p77 = por %p75, %p76
    %p78 = scmp.ne.s32.totalorder %s70, %s72
    %p79 = scmp.eq.s32.totalorder %s20, 1
    %p80 = por %p78, %p79
    %p81 = scmp.ne.s32.totalorder %s72, %s73
    %p82 = scmp.eq.s32.totalorder %s20, 0
    %p83 = por %p81, %p82
    %p84 = scmp.ne.s32.totalorder %s72, %s73
    %p85 = scmp.eq.s32.totalorder %s21, 1
    %p86 = por %p84, %p85
    %p88 = scmp.ne.s32.totalorder %s73, %s87
    %p89 = scmp.eq.s32.totalorder %s21, 0
    %p90 = por %p88, %p89
    %s92 = sadd.s32 %s91, 1
    %p95 = scmp.eq.s32.totalorder %s15, 1
    %p96 = scmp.ne.s32.totalorder %s91, %s93
    %p97 = scmp.eq.s32.totalorder %s15, 0
    %p98 = por %p96, %p97
    %p99 = scmp.ne.s32.totalorder %s91, %s93
    %p100 = scmp.eq.s32.totalorder %s20, 1
    %p101 = por %p99, %p100
    %p102 = scmp.ne.s32.totalorder %s93, %s94
    %p103 = scmp.eq.s32.totalorder %s20, 0
    %p104 = por %p102, %p103
    %p105 = scmp.ne.s32.totalorder %s93, %s94
    %p106 = scmp.eq.s32.totalorder %s21, 1
    %p107 = por %p105, %p106
    %p109 = scmp.ne.s32.totalorder %s94, %s108
    %p110 = scmp.eq.s32.totalorder %s21, 0
    %p111 = por %p109, %p110
    %s113 = sadd.s32 %s112, 1
    %p116 = scmp.eq.s32.totalorder %s15, 1
    %p117 = scmp.ne.s32.totalorder %s112, %s114
    %p118 = scmp.eq.s32.totalorder %s15, 0
    %p119 = por %p117, %p118
    %p120 = scmp.ne.s32.totalorder %s112, %s114
    %p121 = scmp.eq.s32.totalorder %s20, 1
    %p122 = por %p120, %p121
    %p123 = scmp.ne.s32.totalorder %s114, %s115
    %p124 = scmp.eq.s32.totalorder %s20, 0
    %p125 = por %p123, %p124
    %p126 = scmp.ne.s32.totalorder %s114, %s115
    %p127 = scmp.eq.s32.totalorder %s21, 1
    %p128 = por %p126, %p127
    %p130 = scmp.ne.s32.totalorder %s115, %s129
    %p131 = scmp.eq.s32.totalorder %s21, 0
    %p132 = por %p130, %p131
    %s134 = sadd.s32 %s133, 1
    %p137 = scmp.eq.s32.totalorder %s15, 1
    %p138 = scmp.ne.s32.totalorder %s133, %s135
    %p139 = scmp.eq.s32.totalorder %s15, 0
    %p140 = por %p138, %p139
    %p141 = scmp.ne.s32.totalorder %s133, %s135
    %p142 = scmp.eq.s32.totalorder %s20, 1
    %p143 = por %p141, %p142
    %p144 = scmp.ne.s32.totalorder %s135, %s136
    %p145 = scmp.eq.s32.totalorder %s20, 0
    %p146 = por %p144, %p145
    %p147 = scmp.ne.s32.totalorder %s135, %s136
    %p148 = scmp.eq.s32.totalorder %s21, 1
    %p149 = por %p147, %p148
    %p151 = scmp.ne.s32.totalorder %s136, %s150
    %p152 = scmp.eq.s32.totalorder %s21, 0
    %p153 = por %p151, %p152
    %s155 = sadd.s32 %s154, 1
    %p158 = scmp.eq.s32.totalorder %s15, 1
    %p159 = scmp.ne.s32.totalorder %s154, %s156
    %p160 = scmp.eq.s32.totalorder %s15, 0
    %p161 = por %p159, %p160
    %p162 = scmp.ne.s32.totalorder %s154, %s156
    %p163 = scmp.eq.s32.totalorder %s20, 1
    %p164 = por %p162, %p163
    %p165 = scmp.ne.s32.totalorder %s156, %s157
    %p166 = scmp.eq.s32.totalorder %s20, 0
    %p167 = por %p165, %p166
    %p168 = scmp.ne.s32.totalorder %s156, %s157
    %p169 = scmp.eq.s32.totalorder %s21, 1
    %p170 = por %p168, %p169
    %p172 = scmp.ne.s32.totalorder %s157, %s171
    %p173 = scmp.eq.s32.totalorder %s21, 0
    %p174 = por %p172, %p173
    %s175 = ssub.s32 %s15, %s22
    %p176 = scmp.eq.s32.totalorder %s175, 0
    %s178 = sadd.s32 %s177, 1
    %s179 = scalar_select %p176, %s177, %s178
    %p182 = pneg %p176
    %p183 = scmp.eq.s32.totalorder %s15, 1
    %p184 = por %p182, %p183
    %p185 = scmp.ne.s32.totalorder %s177, %s180
    %p186 = scmp.eq.s32.totalorder %s15, 0
    %p187 = por %p185, %p186
    %p188 = scmp.ne.s32.totalorder %s177, %s180
    %p189 = scmp.eq.s32.totalorder %s20, 1
    %p190 = por %p188, %p189
    %p191 = scmp.ne.s32.totalorder %s180, %s181
    %p192 = scmp.eq.s32.totalorder %s20, 0
    %p193 = por %p191, %p192
    %p194 = scmp.ne.s32.totalorder %s180, %s181
    %p195 = scmp.eq.s32.totalorder %s21, 1
    %p196 = por %p194, %p195
    %p198 = scmp.ne.s32.totalorder %s181, %s197
    %p199 = scmp.eq.s32.totalorder %s21, 0
    %p200 = por %p198, %p199
    %s201 = ssub.s32 %s15, %s22
    %p202 = scmp.eq.s32.totalorder %s201, 0
    %s204 = sadd.s32 %s203, 1
    %s205 = scalar_select %p202, %s203, %s204
    %p208 = pneg %p202
    %p209 = scmp.eq.s32.totalorder %s15, 1
    %p210 = por %p208, %p209
    %p211 = scmp.ne.s32.totalorder %s203, %s206
    %p212 = scmp.eq.s32.totalorder %s15, 0
    %p213 = por %p211, %p212
    %p214 = scmp.ne.s32.totalorder %s203, %s206
    %p215 = scmp.eq.s32.totalorder %s20, 1
    %p216 = por %p214, %p215
    %p217 = scmp.ne.s32.totalorder %s206, %s207
    %p218 = scmp.eq.s32.totalorder %s20, 0
    %p219 = por %p217, %p218
    %p220 = scmp.ne.s32.totalorder %s206, %s207
    %p221 = scmp.eq.s32.totalorder %s21, 1
    %p222 = por %p220, %p221
    %p224 = scmp.ne.s32.totalorder %s207, %s223
    %p225 = scmp.eq.s32.totalorder %s21, 0
    %p226 = por %p224, %p225
    %p227 = scmp.le.s32.totalorder 1, %s15
    %p228 = scmp.lt.s32.totalorder %s15, 3
    %p229 = pnand %p227, %p228
    %p230 = pneg %p229
    // Predicated region
    $region9: #{dqn_forward_raw.1} parent=5 // pred_check
      _
    $region10: #{dqn_forward_raw.1} parent=5 // pred_check_branch
      %232 = sbr.rel (%p229) target = $region12
    $region11: #{dqn_forward_raw.1} parent=5 // pred_region
      %s233 = ssub.s32 %s15, 1
      // Predicated region
      $region13: #{dqn_forward_raw.1} parent=11 // pred_check
        %p234 = pneg %p62
      $region14: #{dqn_forward_raw.1} parent=11 // pred_check_branch
        %236 = sbr.rel (%p234) target = $region16
      $region15: #{dqn_forward_raw.1} parent=11 // pred_region
        _
      $region16: #{dqn_forward_raw.1} parent=11 // pred_fallthru
        _
      // Predicated region
      $region17: #{dqn_forward_raw.1} parent=11 // pred_check
        %p237 = pneg %p83
      $region18: #{dqn_forward_raw.1} parent=11 // pred_check_branch
        %239 = sbr.rel (%p237) target = $region20
      $region19: #{dqn_forward_raw.1} parent=11 // pred_region
        _
      $region20: #{dqn_forward_raw.1} parent=11 // pred_fallthru
        _
      // Predicated region
      $region21: #{dqn_forward_raw.1} parent=11 // pred_check
        %p240 = pneg %p104
      $region22: #{dqn_forward_raw.1} parent=11 // pred_check_branch
        %242 = sbr.rel (%p240) target = $region24
      $region23: #{dqn_forward_raw.1} parent=11 // pred_region
        _
      $region24: #{dqn_forward_raw.1} parent=11 // pred_fallthru
        _
      // Predicated region
      $region25: #{dqn_forward_raw.1} parent=11 // pred_check
        %p243 = pneg %p125
      $region26: #{dqn_forward_raw.1} parent=11 // pred_check_branch
        %245 = sbr.rel (%p243) target = $region28
      $region27: #{dqn_forward_raw.1} parent=11 // pred_region
        _
      $region28: #{dqn_forward_raw.1} parent=11 // pred_fallthru
        _
      // Predicated region
      $region29: #{dqn_forward_raw.1} parent=11 // pred_check
        %p246 = pneg %p146
      $region30: #{dqn_forward_raw.1} parent=11 // pred_check_branch
        %248 = sbr.rel (%p246) target = $region32
      $region31: #{dqn_forward_raw.1} parent=11 // pred_region
        _
      $region32: #{dqn_forward_raw.1} parent=11 // pred_fallthru
        _
      // Predicated region
      $region33: #{dqn_forward_raw.1} parent=11 // pred_check
        %p249 = pneg %p167
      $region34: #{dqn_forward_raw.1} parent=11 // pred_check_branch
        %251 = sbr.rel (%p249) target = $region36
      $region35: #{dqn_forward_raw.1} parent=11 // pred_region
        _
      $region36: #{dqn_forward_raw.1} parent=11 // pred_fallthru
        _
    $region12: #{dqn_forward_raw.1} parent=5 // pred_fallthru
      _
    %p252 = scmp.lt.s32.totalorder %s15, 2
    // Predicated region
    $region37: #{dqn_forward_raw.1} parent=5 // pred_check
      %p253 = pneg %p252
    $region38: #{dqn_forward_raw.1} parent=5 // pred_check_branch
      %255 = sbr.rel (%p253) target = $region40
    $region39: #{dqn_forward_raw.1} parent=5 // pred_region
      // Predicated region
      $region41: #{dqn_forward_raw.1} parent=39 // pred_check
        %p256 = pneg %p35
      $region42: #{dqn_forward_raw.1} parent=39 // pred_check_branch
        %258 = sbr.rel (%p256) target = $region44
      $region43: #{dqn_forward_raw.1} parent=39 // pred_region
        %s259 = smul.u32 8, %s15
        %p260 = scmp.lt.s32.totalorder %s259, 15
        %s261 = scalar_select %p260, %s259, 15
        %s262 = smul.addr %s261, 8
        %s263 = scalar_lea.vmem %s0, %s262
        %s264 = smul.u32 8, %s15
      $region44: #{dqn_forward_raw.1} parent=39 // pred_fallthru
        _
    $region40: #{dqn_forward_raw.1} parent=5 // pred_fallthru
      _
    %p265 = scmp.le.s32.totalorder 1, %s15
    %p266 = scmp.lt.s32.totalorder %s15, 3
    %p267 = pnand %p265, %p266
    %p268 = pneg %p267
    // Predicated region
    $region45: #{dqn_forward_raw.1} parent=5 // pred_check
      _
    $region46: #{dqn_forward_raw.1} parent=5 // pred_check_branch
      %270 = sbr.rel (%p267) target = $region48
    $region47: #{dqn_forward_raw.1} parent=5 // pred_region
      %s271 = ssub.s32 %s15, 1
      %s272 = smul.u32 8, %s20
      %p273 = scmp.lt.s32.totalorder %s272, 15
      %s274 = scalar_select %p273, %s272, 15
      %s275 = smul.addr %s274, 8
      %s276 = scalar_lea.vmem %s0, %s275
      %p277 = pneg %p41
      %p278 = pneg %p38
      %p279 = pneg %p62
      %p280 = pneg %p59
      %p281 = pneg %p83
      %p282 = pneg %p80
      %p283 = pneg %p104
      %p284 = pneg %p101
      %p285 = pneg %p125
      %p286 = pneg %p122
      %p287 = pneg %p146
      %p288 = pneg %p143
      %p289 = pneg %p167
      %p290 = pneg %p164
      %p291 = pneg %p193
      %p292 = pneg %p190
      %s293 = smul.u32 8, %s20
      %p294 = scmp.lt.s32.totalorder %s293, 15
      %s295 = scalar_select %p294, %s293, 15
      %s296 = smul.addr %s295, 8
      %s297 = scalar_lea.vmem %s7, %s296
      %p298 = pneg %p219
      %p299 = pneg %p216
      %s300 = smul.u32 8, %s20
      %p301 = scmp.lt.s32.totalorder %s300, 15
      %s302 = scalar_select %p301, %s300, 15
      %s303 = smul.addr %s302, 8
      %s304 = scalar_lea.vmem %s8, %s303
      %s305 = smul.u32 8, %s20
      %p306 = scmp.lt.s32.totalorder %s305, 15
      %s307 = scalar_select %p306, %s305, 15
      %s308 = smul.addr %s307, 8
      %s309 = scalar_lea.vmem %s0, %s308
      %s310 = smul.u32 8, %s20
      %s311 = smul.u32 8, %s20
      %p312 = scmp.lt.s32.totalorder %s311, 15
      %s313 = scalar_select %p312, %s311, 15
      %s314 = smul.addr %s313, 8
      %s315 = scalar_lea.vmem %s7, %s314
      %s316 = smul.u32 8, %s20
      %s317 = smul.u32 8, %s20
      %p318 = scmp.lt.s32.totalorder %s317, 15
      %s319 = scalar_select %p318, %s317, 15
      %s320 = smul.addr %s319, 8
      %s321 = scalar_lea.vmem %s8, %s320
      %s322 = smul.u32 8, %s20
      %v324 = vld [vmem:[%s309] sm:$0xff]
      %v325 = vld [vmem:[%s309 + $0x8] sm:$0xff]
      %v326 = vld [vmem:[%s309 + $0x10] sm:$0xff]
      %v327 = vld [vmem:[%s309 + $0x18] sm:$0xff]
      %v328 = vld [vmem:[%s309 + $0x20] sm:$0xff]
      %v329 = vld [vmem:[%s309 + $0x28] sm:$0xff]
      %v330 = vld [vmem:[%s309 + $0x30] sm:$0xff]
      %v331 = vld [vmem:[%s309 + $0x38] sm:$0xff]
      %v332 = vld [vmem:[%s1] sm:$0xf]
      %v333 = vld [vmem:[%s2] sm:$0x1]
      %335 = vset.pattern.permute.xlu0 0
      %336 = vperm.xlu0 %335, %v324
      %v337 = vpop.permute.xlu0 %336
      %340 = vset.pattern.permute.xlu0 0
      %341 = vperm.xlu0 %340, %v325
      %v342 = vpop.permute.xlu0 %341
      %345 = vset.pattern.permute.xlu0 0
      %346 = vperm.xlu0 %345, %v326
      %v347 = vpop.permute.xlu0 %346
      %350 = vset.pattern.permute.xlu0 0
      %351 = vperm.xlu0 %350, %v327
      %v352 = vpop.permute.xlu0 %351
      %355 = vset.pattern.permute.xlu0 0
      %356 = vperm.xlu0 %355, %v328
      %v357 = vpop.permute.xlu0 %356
      %360 = vset.pattern.permute.xlu0 0
      %361 = vperm.xlu0 %360, %v329
      %v362 = vpop.permute.xlu0 %361
      %365 = vset.pattern.permute.xlu0 0
      %366 = vperm.xlu0 %365, %v330
      %v367 = vpop.permute.xlu0 %366
      %370 = vset.pattern.permute.xlu0 0
      %371 = vperm.xlu0 %370, %v331
      %v372 = vpop.permute.xlu0 %371
      %v374 = vlaneseq
      %v375 = vshrl.u32 %v374, 7
      %v376 = vsub.s32 0, %v375
      %v377 = vrot.slane %v332, %v376
      %v378 = vmul.f32 %v337, %v377
      %v379 = vmul.f32 %v342, %v377
      %v380 = vmul.f32 %v347, %v377
      %v381 = vmul.f32 %v352, %v377
      %v382 = vmul.f32 %v357, %v377
      %v383 = vmul.f32 %v362, %v377
      %v384 = vmul.f32 %v367, %v377
      %v385 = vmul.f32 %v372, %v377
      %v387 = vlaneseq
      %v388 = vshrl.u32 %v387, 7
      %v389 = vsub.s32 0, %v388
      %v390 = vrot.slane %v333, %v389
      %v392 = vadd.f32 %v390, %v378
      %v393 = vadd.f32 %v390, %v379
      %v394 = vadd.f32 %v390, %v380
      %v395 = vadd.f32 %v390, %v381
      %v396 = vadd.f32 %v390, %v382
      %v397 = vadd.f32 %v390, %v383
      %v398 = vadd.f32 %v390, %v384
      %v399 = vadd.f32 %v390, %v385
      %400 = vset.pattern.permute.xlu0 1
      %401 = vperm.xlu0 %400, %v324
      %v402 = vpop.permute.xlu0 %401
      %404 = vset.pattern.permute.xlu0 1
      %405 = vperm.xlu0 %404, %v325
      %v406 = vpop.permute.xlu0 %405
      %408 = vset.pattern.permute.xlu0 1
      %409 = vperm.xlu0 %408, %v326
      %v410 = vpop.permute.xlu0 %409
      %412 = vset.pattern.permute.xlu0 1
      %413 = vperm.xlu0 %412, %v327
      %v414 = vpop.permute.xlu0 %413
      %416 = vset.pattern.permute.xlu0 1
      %417 = vperm.xlu0 %416, %v328
      %v418 = vpop.permute.xlu0 %417
      %420 = vset.pattern.permute.xlu0 1
      %421 = vperm.xlu0 %420, %v329
      %v422 = vpop.permute.xlu0 %421
      %424 = vset.pattern.permute.xlu0 1
      %425 = vperm.xlu0 %424, %v330
      %v426 = vpop.permute.xlu0 %425
      %428 = vset.pattern.permute.xlu0 1
      %429 = vperm.xlu0 %428, %v331
      %v430 = vpop.permute.xlu0 %429
      %v432 = vlaneseq
      %v433 = vshrl.u32 %v432, 7
      %v434 = vsub.s32 1, %v433
      %v435 = vrot.slane %v332, %v434
      %v436 = vmul.f32 %v402, %v435
      %v437 = vmul.f32 %v406, %v435
      %v438 = vmul.f32 %v410, %v435
      %v439 = vmul.f32 %v414, %v435
      %v440 = vmul.f32 %v418, %v435
      %v441 = vmul.f32 %v422, %v435
      %v442 = vmul.f32 %v426, %v435
      %v443 = vmul.f32 %v430, %v435
      %v444 = vadd.f32 %v392, %v436
      %v445 = vadd.f32 %v393, %v437
      %v446 = vadd.f32 %v394, %v438
      %v447 = vadd.f32 %v395, %v439
      %v448 = vadd.f32 %v396, %v440
      %v449 = vadd.f32 %v397, %v441
      %v450 = vadd.f32 %v398, %v442
      %v451 = vadd.f32 %v399, %v443
      %452 = vset.pattern.permute.xlu0 2
      %453 = vperm.xlu0 %452, %v324
      %v454 = vpop.permute.xlu0 %453
      %456 = vset.pattern.permute.xlu0 2
      %457 = vperm.xlu0 %456, %v325
      %v458 = vpop.permute.xlu0 %457
      %460 = vset.pattern.permute.xlu0 2
      %461 = vperm.xlu0 %460, %v326
      %v462 = vpop.permute.xlu0 %461
      %464 = vset.pattern.permute.xlu0 2
      %465 = vperm.xlu0 %464, %v327
      %v466 = vpop.permute.xlu0 %465
      %468 = vset.pattern.permute.xlu0 2
      %469 = vperm.xlu0 %468, %v328
      %v470 = vpop.permute.xlu0 %469
      %472 = vset.pattern.permute.xlu0 2
      %473 = vperm.xlu0 %472, %v329
      %v474 = vpop.permute.xlu0 %473
      %476 = vset.pattern.permute.xlu0 2
      %477 = vperm.xlu0 %476, %v330
      %v478 = vpop.permute.xlu0 %477
      %480 = vset.pattern.permute.xlu0 2
      %481 = vperm.xlu0 %480, %v331
      %v482 = vpop.permute.xlu0 %481
      %v484 = vlaneseq
      %v485 = vshrl.u32 %v484, 7
      %v486 = vsub.s32 2, %v485
      %v487 = vrot.slane %v332, %v486
      %v488 = vmul.f32 %v454, %v487
      %v489 = vmul.f32 %v458, %v487
      %v490 = vmul.f32 %v462, %v487
      %v491 = vmul.f32 %v466, %v487
      %v492 = vmul.f32 %v470, %v487
      %v493 = vmul.f32 %v474, %v487
      %v494 = vmul.f32 %v478, %v487
      %v495 = vmul.f32 %v482, %v487
      %v496 = vadd.f32 %v444, %v488
      %v497 = vadd.f32 %v445, %v489
      %v498 = vadd.f32 %v446, %v490
      %v499 = vadd.f32 %v447, %v491
      %v500 = vadd.f32 %v448, %v492
      %v501 = vadd.f32 %v449, %v493
      %v502 = vadd.f32 %v450, %v494
      %v503 = vadd.f32 %v451, %v495
      %504 = vset.pattern.permute.xlu0 3
      %505 = vperm.xlu0 %504, %v324
      %v506 = vpop.permute.xlu0 %505
      %508 = vset.pattern.permute.xlu0 3
      %509 = vperm.xlu0 %508, %v325
      %v510 = vpop.permute.xlu0 %509
      %512 = vset.pattern.permute.xlu0 3
      %513 = vperm.xlu0 %512, %v326
      %v514 = vpop.permute.xlu0 %513
      %516 = vset.pattern.permute.xlu0 3
      %517 = vperm.xlu0 %516, %v327
      %v518 = vpop.permute.xlu0 %517
      %520 = vset.pattern.permute.xlu0 3
      %521 = vperm.xlu0 %520, %v328
      %v522 = vpop.permute.xlu0 %521
      %524 = vset.pattern.permute.xlu0 3
      %525 = vperm.xlu0 %524, %v329
      %v526 = vpop.permute.xlu0 %525
      %528 = vset.pattern.permute.xlu0 3
      %529 = vperm.xlu0 %528, %v330
      %v530 = vpop.permute.xlu0 %529
      %532 = vset.pattern.permute.xlu0 3
      %533 = vperm.xlu0 %532, %v331
      %v534 = vpop.permute.xlu0 %533
      %v536 = vlaneseq
      %v537 = vshrl.u32 %v536, 7
      %v538 = vsub.s32 3, %v537
      %v539 = vrot.slane %v332, %v538
      %v540 = vmul.f32 %v506, %v539
      %v541 = vmul.f32 %v510, %v539
      %v542 = vmul.f32 %v514, %v539
      %v543 = vmul.f32 %v518, %v539
      %v544 = vmul.f32 %v522, %v539
      %v545 = vmul.f32 %v526, %v539
      %v546 = vmul.f32 %v530, %v539
      %v547 = vmul.f32 %v534, %v539
      %v548 = vadd.f32 %v496, %v540
      %v549 = vadd.f32 %v497, %v541
      %v550 = vadd.f32 %v498, %v542
      %v551 = vadd.f32 %v499, %v543
      %v552 = vadd.f32 %v500, %v544
      %v553 = vadd.f32 %v501, %v545
      %v554 = vadd.f32 %v502, %v546
      %v555 = vadd.f32 %v503, %v547
      %v556 = vmax.f32 %v548, 0.0
      %v557 = vmax.f32 %v549, 0.0
      %v558 = vmax.f32 %v550, 0.0
      %v559 = vmax.f32 %v551, 0.0
      %v560 = vmax.f32 %v552, 0.0
      %v561 = vmax.f32 %v553, 0.0
      %v562 = vmax.f32 %v554, 0.0
      %v563 = vmax.f32 %v555, 0.0
      %v564 = vpack.c.bf16 %v557, %v556
      %v565 = vpack.c.bf16 %v559, %v558
      %v566 = vpack.c.bf16 %v561, %v560
      %v567 = vpack.c.bf16 %v563, %v562
      %v568 = vld [vmem:[%s3] sm:$0xf]
      %v569 = vld [vmem:[%s3 + $0x4] sm:$0xf]
      %v570 = vld [vmem:[%s3 + $0x8] sm:$0xf]
      %v571 = vld [vmem:[%s3 + $0xc] sm:$0xf]
      %v572 = vld [vmem:[%s3 + $0x10] sm:$0xf]
      %v573 = vld [vmem:[%s3 + $0x14] sm:$0xf]
      %v574 = vld [vmem:[%s3 + $0x18] sm:$0xf]
      %v575 = vld [vmem:[%s3 + $0x1c] sm:$0xf]
      %v576 = vld [vmem:[%s3 + $0x20] sm:$0xf]
      %v577 = vld [vmem:[%s3 + $0x24] sm:$0xf]
      %v578 = vld [vmem:[%s3 + $0x28] sm:$0xf]
      %v579 = vld [vmem:[%s3 + $0x2c] sm:$0xf]
      %v580 = vld [vmem:[%s3 + $0x30] sm:$0xf]
      %v581 = vld [vmem:[%s3 + $0x34] sm:$0xf]
      %v582 = vld [vmem:[%s3 + $0x38] sm:$0xf]
      %v583 = vld [vmem:[%s3 + $0x3c] sm:$0xf]
      %v584 = vld [vmem:[%s4] sm:$0x1]
      %v586 = vlaneseq
      %v587 = vshrl.u32 %v586, 7
      %v588 = vsub.s32 0, %v587
      %v589 = vrot.slane %v584, %v588
      %v607 = vunpack.c.l.b16 %v568
      %v608 = vunpack.c.l.b16 %v569
      %v609 = vunpack.c.l.b16 %v570
      %v610 = vunpack.c.l.b16 %v571
      %v611 = vunpack.c.l.b16 %v572
      %v612 = vunpack.c.l.b16 %v573
      %v613 = vunpack.c.l.b16 %v574
      %v614 = vunpack.c.l.b16 %v575
      %v615 = vunpack.c.l.b16 %v576
      %v616 = vunpack.c.l.b16 %v577
      %v617 = vunpack.c.l.b16 %v578
      %v618 = vunpack.c.l.b16 %v579
      %v619 = vunpack.c.l.b16 %v580
      %v620 = vunpack.c.l.b16 %v581
      %v621 = vunpack.c.l.b16 %v582
      %v622 = vunpack.c.l.b16 %v583
      %v623 = vpack.c.b16 %v608, %v607
      %v624 = vpack.c.b16 %v610, %v609
      %v625 = vpack.c.b16 %v612, %v611
      %v626 = vpack.c.b16 %v614, %v613
      %v627 = vpack.c.b16 %v616, %v615
      %v628 = vpack.c.b16 %v618, %v617
      %v629 = vpack.c.b16 %v620, %v619
      %v630 = vpack.c.b16 %v622, %v621
      %639 = vmatprep.subr.bf16.mxu0 0
      %640 = vmatpush1.bf16.msra.mxu0 %v630
      %641 = vmatprep.subr.bf16.mxu0 0
      %642 = vmatpush1.bf16.msra.mxu0 %v629
      %643 = vmatprep.subr.bf16.mxu0 0
      %644 = vmatpush1.bf16.msra.mxu0 %v628
      %645 = vmatprep.subr.bf16.mxu0 0
      %646 = vmatpush1.bf16.msra.mxu0 %v627
      %647 = vmatprep.subr.bf16.mxu0 0
      %648 = vmatpush1.bf16.msra.mxu0 %v626
      %649 = vmatprep.subr.bf16.mxu0 0
      %650 = vmatpush1.bf16.msra.mxu0 %v625
      %651 = vmatprep.subr.bf16.mxu0 0
      %652 = vmatpush1.bf16.msra.mxu0 %v624
      %653 = vmatprep.subr.bf16.mxu0 0
      %654 = vmatpush1.bf16.msra.mxu0 %v623
      %655 = vmatprep.subr.bf16.mxu0 0
      %656 = vmatpush2.bf16.msra.mxu0 0
      %657 = vmatprep.subr.bf16.mxu0 0
      %658 = vmatpush2.bf16.msra.mxu0 0
      %659 = vmatprep.subr.bf16.mxu0 0
      %660 = vmatpush2.bf16.msra.mxu0 0
      %661 = vmatprep.subr.bf16.mxu0 0
      %662 = vmatpush2.bf16.msra.mxu0 0
      %663 = vmatprep.subr.bf16.mxu0 0
      %664 = vmatpush2.bf16.msra.mxu0 0
      %665 = vmatprep.subr.bf16.mxu0 0
      %666 = vmatpush2.bf16.msra.mxu0 0
      %667 = vmatprep.subr.bf16.mxu0 0
      %668 = vmatpush2.bf16.msra.mxu0 0
      %669 = vmatprep.subr.bf16.mxu0 0
      %670 = vmatpush2.bf16.msra.mxu0 0
      %671 = vmatprep.mubr.bf16.mxu0 0
      %672 = vmatmul.mubr.bf16.gmra.mxu0 %v564
      %v673 = vpop.f32.mrf.mxu0
      %v674 = vadd.f32 %v589, %v673
      %v675 = vpop.f32.mrf.mxu0
      %v676 = vpop.f32.mrf.mxu0
      %v677 = vadd.f32 %v589, %v676
      %v678 = vpop.f32.mrf.mxu0
      %679 = vmatprep.mubr.bf16.mxu0 0
      %680 = vmatmul.mubr.bf16.gmra.mxu0 %v565
      %v681 = vpop.f32.mrf.mxu0
      %v682 = vadd.f32 %v589, %v681
      %v683 = vpop.f32.mrf.mxu0
      %v684 = vpop.f32.mrf.mxu0
      %v685 = vadd.f32 %v589, %v684
      %v686 = vpop.f32.mrf.mxu0
      %687 = vmatprep.mubr.bf16.mxu0 0
      %688 = vmatmul.mubr.bf16.gmra.mxu0 %v566
      %v689 = vpop.f32.mrf.mxu0
      %v690 = vadd.f32 %v589, %v689
      %v691 = vpop.f32.mrf.mxu0
      %v692 = vpop.f32.mrf.mxu0
      %v693 = vadd.f32 %v589, %v692
      %v694 = vpop.f32.mrf.mxu0
      %695 = vmatprep.mubr.bf16.mxu0 0
      %696 = vmatmul.mubr.bf16.gmra.mxu0 %v567
      %v697 = vpop.f32.mrf.mxu0
      %v698 = vadd.f32 %v589, %v697
      %v699 = vpop.f32.mrf.mxu0
      %v700 = vpop.f32.mrf.mxu0
      %v701 = vadd.f32 %v589, %v700
      %v702 = vpop.f32.mrf.mxu0
      %703 = vdwg.mxu0
      %v704 = vmax.f32 %v674, 0.0
      %v705 = vmax.f32 %v677, 0.0
      %v706 = vmax.f32 %v682, 0.0
      %v707 = vmax.f32 %v685, 0.0
      %v708 = vmax.f32 %v690, 0.0
      %v709 = vmax.f32 %v693, 0.0
      %v710 = vmax.f32 %v698, 0.0
      %v711 = vmax.f32 %v701, 0.0
      %v712 = vpack.c.bf16 %v705, %v704
      %v713 = vpack.c.bf16 %v707, %v706
      %v714 = vpack.c.bf16 %v709, %v708
      %v715 = vpack.c.bf16 %v711, %v710
      %v716 = vld [vmem:[%s5] sm:$0xf]
      %v717 = vld [vmem:[%s5 + $0x4] sm:$0xf]
      %v718 = vld [vmem:[%s5 + $0x8] sm:$0xf]
      %v719 = vld [vmem:[%s5 + $0xc] sm:$0xf]
      %v720 = vld [vmem:[%s5 + $0x10] sm:$0xf]
      %v721 = vld [vmem:[%s5 + $0x14] sm:$0xf]
      %v722 = vld [vmem:[%s5 + $0x18] sm:$0xf]
      %v723 = vld [vmem:[%s5 + $0x1c] sm:$0xf]
      %v724 = vld [vmem:[%s5 + $0x20] sm:$0xf]
      %v725 = vld [vmem:[%s5 + $0x24] sm:$0xf]
      %v726 = vld [vmem:[%s5 + $0x28] sm:$0xf]
      %v727 = vld [vmem:[%s5 + $0x2c] sm:$0xf]
      %v728 = vld [vmem:[%s5 + $0x30] sm:$0xf]
      %v729 = vld [vmem:[%s5 + $0x34] sm:$0xf]
      %v730 = vld [vmem:[%s5 + $0x38] sm:$0xf]
      %v731 = vld [vmem:[%s5 + $0x3c] sm:$0xf]
      %v732 = vld [vmem:[%s6] sm:$0x1]
      %v734 = vlaneseq
      %v735 = vshrl.u32 %v734, 7
      %v736 = vsub.s32 0, %v735
      %v737 = vrot.slane %v732, %v736
      %v755 = vunpack.c.l.b16 %v716
      %v756 = vunpack.c.l.b16 %v717
      %v757 = vunpack.c.l.b16 %v718
      %v758 = vunpack.c.l.b16 %v719
      %v759 = vunpack.c.l.b16 %v720
      %v760 = vunpack.c.l.b16 %v721
      %v761 = vunpack.c.l.b16 %v722
      %v762 = vunpack.c.l.b16 %v723
      %v763 = vunpack.c.l.b16 %v724
      %v764 = vunpack.c.l.b16 %v725
      %v765 = vunpack.c.l.b16 %v726
      %v766 = vunpack.c.l.b16 %v727
      %v767 = vunpack.c.l.b16 %v728
      %v768 = vunpack.c.l.b16 %v729
      %v769 = vunpack.c.l.b16 %v730
      %v770 = vunpack.c.l.b16 %v731
      %v771 = vpack.c.b16 %v756, %v755
      %v772 = vpack.c.b16 %v758, %v757
      %v773 = vpack.c.b16 %v760, %v759
      %v774 = vpack.c.b16 %v762, %v761
      %v775 = vpack.c.b16 %v764, %v763
      %v776 = vpack.c.b16 %v766, %v765
      %v777 = vpack.c.b16 %v768, %v767
      %v778 = vpack.c.b16 %v770, %v769
      %787 = vmatprep.subr.bf16.mxu0 0
      %788 = vmatpush1.bf16.msra.mxu0 %v778
      %789 = vmatprep.subr.bf16.mxu0 0
      %790 = vmatpush1.bf16.msra.mxu0 %v777
      %791 = vmatprep.subr.bf16.mxu0 0
      %792 = vmatpush1.bf16.msra.mxu0 %v776
      %793 = vmatprep.subr.bf16.mxu0 0
      %794 = vmatpush1.bf16.msra.mxu0 %v775
      %795 = vmatprep.subr.bf16.mxu0 0
      %796 = vmatpush1.bf16.msra.mxu0 %v774
      %797 = vmatprep.subr.bf16.mxu0 0
      %798 = vmatpush1.bf16.msra.mxu0 %v773
      %799 = vmatprep.subr.bf16.mxu0 0
      %800 = vmatpush1.bf16.msra.mxu0 %v772
      %801 = vmatprep.subr.bf16.mxu0 0
      %802 = vmatpush1.bf16.msra.mxu0 %v771
      %803 = vmatprep.subr.bf16.mxu0 0
      %804 = vmatpush2.bf16.msra.mxu0 0
      %805 = vmatprep.subr.bf16.mxu0 0
      %806 = vmatpush2.bf16.msra.mxu0 0
      %807 = vmatprep.subr.bf16.mxu0 0
      %808 = vmatpush2.bf16.msra.mxu0 0
      %809 = vmatprep.subr.bf16.mxu0 0
      %810 = vmatpush2.bf16.msra.mxu0 0
      %811 = vmatprep.subr.bf16.mxu0 0
      %812 = vmatpush2.bf16.msra.mxu0 0
      %813 = vmatprep.subr.bf16.mxu0 0
      %814 = vmatpush2.bf16.msra.mxu0 0
      %815 = vmatprep.subr.bf16.mxu0 0
      %816 = vmatpush2.bf16.msra.mxu0 0
      %817 = vmatprep.subr.bf16.mxu0 0
      %818 = vmatpush2.bf16.msra.mxu0 0
      %819 = vmatprep.mubr.bf16.mxu0 0
      %820 = vmatmul.mubr.bf16.gmra.mxu0 %v712
      %v821 = vpop.f32.mrf.mxu0
      %v822 = vadd.f32 %v737, %v821
      %v823 = vpop.f32.mrf.mxu0
      %v824 = vpop.f32.mrf.mxu0
      %v825 = vadd.f32 %v737, %v824
      %v826 = vpop.f32.mrf.mxu0
      %827 = vmatprep.mubr.bf16.mxu0 0
      %828 = vmatmul.mubr.bf16.gmra.mxu0 %v713
      %v829 = vpop.f32.mrf.mxu0
      %v830 = vadd.f32 %v737, %v829
      %v831 = vpop.f32.mrf.mxu0
      %v832 = vpop.f32.mrf.mxu0
      %v833 = vadd.f32 %v737, %v832
      %v834 = vpop.f32.mrf.mxu0
      %835 = vmatprep.mubr.bf16.mxu0 0
      %836 = vmatmul.mubr.bf16.gmra.mxu0 %v714
      %v837 = vpop.f32.mrf.mxu0
      %v838 = vadd.f32 %v737, %v837
      %v839 = vpop.f32.mrf.mxu0
      %v840 = vpop.f32.mrf.mxu0
      %v841 = vadd.f32 %v737, %v840
      %v842 = vpop.f32.mrf.mxu0
      %843 = vmatprep.mubr.bf16.mxu0 0
      %844 = vmatmul.mubr.bf16.gmra.mxu0 %v715
      %v845 = vpop.f32.mrf.mxu0
      %v846 = vadd.f32 %v737, %v845
      %v847 = vpop.f32.mrf.mxu0
      %v848 = vpop.f32.mrf.mxu0
      %v849 = vadd.f32 %v737, %v848
      %v850 = vpop.f32.mrf.mxu0
      %851 = vdwg.mxu0
      %vm852 = vcmask 64512
      %853 = vst.msk [vmem:[%s315] sm:$0xff] %vm852, %v822
      %854 = vst.msk [vmem:[%s315 + $0x8] sm:$0xff] %vm852, %v825
      %855 = vst.msk [vmem:[%s315 + $0x10] sm:$0xff] %vm852, %v830
      %856 = vst.msk [vmem:[%s315 + $0x18] sm:$0xff] %vm852, %v833
      %857 = vst.msk [vmem:[%s315 + $0x20] sm:$0xff] %vm852, %v838
      %858 = vst.msk [vmem:[%s315 + $0x28] sm:$0xff] %vm852, %v841
      %859 = vst.msk [vmem:[%s315 + $0x30] sm:$0xff] %vm852, %v846
      %860 = vst.msk [vmem:[%s315 + $0x38] sm:$0xff] %vm852, %v849
      %v861 = vlaneseq
      %v862 = vand.u32 %v861, 127
      %vm863 = vcmp.lt.s32.totalorder %v862, 2
      %v864 = vsel %vm863, %v822, -inf
      %v865 = vsel %vm863, %v825, -inf
      %v866 = vsel %vm863, %v830, -inf
      %v867 = vsel %vm863, %v833, -inf
      %v868 = vsel %vm863, %v838, -inf
      %v869 = vsel %vm863, %v841, -inf
      %v870 = vsel %vm863, %v846, -inf
      %v871 = vsel %vm863, %v849, -inf
      %v872 = vsel %vm852, %v864, -inf
      %873 = vmax.xlane.f32.xlu0 %v872
      %v874 = vpop.xlane.xlu0 %873
      %v875 = vsel %vm852, %v865, -inf
      %876 = vmax.xlane.f32.xlu0 %v875
      %v877 = vpop.xlane.xlu0 %876
      %v878 = vsel %vm852, %v866, -inf
      %879 = vmax.xlane.f32.xlu0 %v878
      %v880 = vpop.xlane.xlu0 %879
      %v881 = vsel %vm852, %v867, -inf
      %882 = vmax.xlane.f32.xlu0 %v881
      %v883 = vpop.xlane.xlu0 %882
      %v884 = vsel %vm852, %v868, -inf
      %885 = vmax.xlane.f32.xlu0 %v884
      %v886 = vpop.xlane.xlu0 %885
      %v887 = vsel %vm852, %v869, -inf
      %888 = vmax.xlane.f32.xlu0 %v887
      %v889 = vpop.xlane.xlu0 %888
      %v890 = vsel %vm852, %v870, -inf
      %891 = vmax.xlane.f32.xlu0 %v890
      %v892 = vpop.xlane.xlu0 %891
      %v893 = vsel %vm852, %v871, -inf
      %894 = vmax.xlane.f32.xlu0 %v893
      %v895 = vpop.xlane.xlu0 %894
      %vm896 = vcmp.eq.f32.partialorder %v864, %v874
      %vm897 = vcmp.eq.f32.partialorder %v865, %v877
      %vm898 = vcmp.eq.f32.partialorder %v866, %v880
      %vm899 = vcmp.eq.f32.partialorder %v867, %v883
      %vm900 = vcmp.eq.f32.partialorder %v868, %v886
      %vm901 = vcmp.eq.f32.partialorder %v869, %v889
      %vm902 = vcmp.eq.f32.partialorder %v870, %v892
      %vm903 = vcmp.eq.f32.partialorder %v871, %v895
      %vm904 = vmand %vm896, %vm863
      %vm905 = vmand %vm897, %vm863
      %vm906 = vmand %vm898, %vm863
      %vm907 = vmand %vm899, %vm863
      %vm908 = vmand %vm900, %vm863
      %vm909 = vmand %vm901, %vm863
      %vm910 = vmand %vm902, %vm863
      %vm911 = vmand %vm903, %vm863
      %v912 = vcvt.s32.f32 %v862
      %v913 = vsel %vm904, %v912, 8.0
      %v914 = vsel %vm905, %v912, 8.0
      %v915 = vsel %vm906, %v912, 8.0
      %v916 = vsel %vm907, %v912, 8.0
      %v917 = vsel %vm908, %v912, 8.0
      %v918 = vsel %vm909, %v912, 8.0
      %v919 = vsel %vm910, %v912, 8.0
      %v920 = vsel %vm911, %v912, 8.0
      %v921 = vsel %vm852, %v913, inf
      %922 = vmin.xlane.f32.xlu0 %v921
      %v923 = vpop.xlane.xlu0 %922
      %v924 = vsel %vm852, %v914, inf
      %925 = vmin.xlane.f32.xlu0 %v924
      %v926 = vpop.xlane.xlu0 %925
      %v927 = vsel %vm852, %v915, inf
      %928 = vmin.xlane.f32.xlu0 %v927
      %v929 = vpop.xlane.xlu0 %928
      %v930 = vsel %vm852, %v916, inf
      %931 = vmin.xlane.f32.xlu0 %v930
      %v932 = vpop.xlane.xlu0 %931
      %v933 = vsel %vm852, %v917, inf
      %934 = vmin.xlane.f32.xlu0 %v933
      %v935 = vpop.xlane.xlu0 %934
      %v936 = vsel %vm852, %v918, inf
      %937 = vmin.xlane.f32.xlu0 %v936
      %v938 = vpop.xlane.xlu0 %937
      %v939 = vsel %vm852, %v919, inf
      %940 = vmin.xlane.f32.xlu0 %v939
      %v941 = vpop.xlane.xlu0 %940
      %v942 = vsel %vm852, %v920, inf
      %943 = vmin.xlane.f32.xlu0 %v942
      %v944 = vpop.xlane.xlu0 %943
      %v945 = vcvt.f32.s32.to.zero.pseudo %v923
      %v946 = vcvt.f32.s32.to.zero.pseudo %v926
      %v947 = vcvt.f32.s32.to.zero.pseudo %v929
      %v948 = vcvt.f32.s32.to.zero.pseudo %v932
      %v949 = vcvt.f32.s32.to.zero.pseudo %v935
      %v950 = vcvt.f32.s32.to.zero.pseudo %v938
      %v951 = vcvt.f32.s32.to.zero.pseudo %v941
      %v952 = vcvt.f32.s32.to.zero.pseudo %v944
      %953 = vst.msk [vmem:[%s321] sm:$0xff] %vm852, %v945
      %954 = vst.msk [vmem:[%s321 + $0x8] sm:$0xff] %vm852, %v946
      %955 = vst.msk [vmem:[%s321 + $0x10] sm:$0xff] %vm852, %v947
      %956 = vst.msk [vmem:[%s321 + $0x18] sm:$0xff] %vm852, %v948
      %957 = vst.msk [vmem:[%s321 + $0x20] sm:$0xff] %vm852, %v949
      %958 = vst.msk [vmem:[%s321 + $0x28] sm:$0xff] %vm852, %v950
      %959 = vst.msk [vmem:[%s321 + $0x30] sm:$0xff] %vm852, %v951
      %960 = vst.msk [vmem:[%s321 + $0x38] sm:$0xff] %vm852, %v952
      %s961 = smul.u32 8, %s20
      %p962 = scmp.lt.s32.totalorder %s961, 15
      %s963 = scalar_select %p962, %s961, 15
      %s964 = smul.addr %s963, 8
      %s965 = scalar_lea.vmem %s7, %s964
      %s966 = smul.u32 8, %s20
      %p967 = scmp.lt.s32.totalorder %s966, 15
      %s968 = scalar_select %p967, %s966, 15
      %s969 = smul.addr %s968, 8
      %s970 = scalar_lea.vmem %s8, %s969
      // Predicated region
      $region49: #{dqn_forward_raw.1} parent=47 // pred_check
        %p971 = pneg %p190
      $region50: #{dqn_forward_raw.1} parent=47 // pred_check_branch
        %973 = sbr.rel (%p971) target = $region52
      $region51: #{dqn_forward_raw.1} parent=47 // pred_region
        %s974 = smul.u32 8, %s20
      $region52: #{dqn_forward_raw.1} parent=47 // pred_fallthru
        _
      // Predicated region
      $region53: #{dqn_forward_raw.1} parent=47 // pred_check
        %p975 = pneg %p216
      $region54: #{dqn_forward_raw.1} parent=47 // pred_check_branch
        %977 = sbr.rel (%p975) target = $region56
      $region55: #{dqn_forward_raw.1} parent=47 // pred_region
        %s978 = smul.u32 8, %s20
      $region56: #{dqn_forward_raw.1} parent=47 // pred_fallthru
        _
    $region48: #{dqn_forward_raw.1} parent=5 // pred_fallthru
      _
    %p979 = scmp.le.s32.totalorder 2, %s15
    // Predicated region
    $region57: #{dqn_forward_raw.1} parent=5 // pred_check
      %p980 = pneg %p979
    $region58: #{dqn_forward_raw.1} parent=5 // pred_check_branch
      %982 = sbr.rel (%p980) target = $region60
    $region59: #{dqn_forward_raw.1} parent=5 // pred_region
      %s983 = ssub.s32 %s15, 2
      // Predicated region
      $region61: #{dqn_forward_raw.1} parent=59 // pred_check
        %p984 = pneg %p196
      $region62: #{dqn_forward_raw.1} parent=59 // pred_check_branch
        %986 = sbr.rel (%p984) target = $region64
      $region63: #{dqn_forward_raw.1} parent=59 // pred_region
        %s987 = smul.u32 8, %s21
        %p988 = scmp.lt.s32.totalorder %s987, 15
        %s989 = scalar_select %p988, %s987, 15
        %s990 = smul.addr %s989, 8
        %s991 = scalar_lea.vmem %s7, %s990
      $region64: #{dqn_forward_raw.1} parent=59 // pred_fallthru
        _
      // Predicated region
      $region65: #{dqn_forward_raw.1} parent=59 // pred_check
        %p992 = pneg %p222
      $region66: #{dqn_forward_raw.1} parent=59 // pred_check_branch
        %994 = sbr.rel (%p992) target = $region68
      $region67: #{dqn_forward_raw.1} parent=59 // pred_region
        %s995 = smul.u32 8, %s21
        %p996 = scmp.lt.s32.totalorder %s995, 15
        %s997 = scalar_select %p996, %s995, 15
        %s998 = smul.addr %s997, 8
        %s999 = scalar_lea.vmem %s8, %s998
      $region68: #{dqn_forward_raw.1} parent=59 // pred_fallthru
        _
    $region60: #{dqn_forward_raw.1} parent=5 // pred_fallthru
      _
  $region6: #{dqn_forward_raw.1} parent=0 // loop_footer
    %s19 = sadd.s32 1, %s15
  $region7: #{dqn_forward_raw.1} parent=0 // loop_footer_branch
    %14 = sbr.rel target = $region3
  $region8: #{dqn_forward_raw.1} parent=0 // loop_exit
    _

</llo_original>
